<compile_context>
chip_gen: v5e
topology: v5e:2x2
jax: 0.10.0
libtpu: 0.0.40
codegen_flags: <defaults>
</compile_context>

<pallas_src>
import jax
import jax.numpy as jnp
from jax import lax
from jax.experimental import pallas as pl
from jax.experimental.pallas import tpu as pltpu


_LANE = 128
_IMG_BLOCK_BYTES = 6 * 1024 * 1024     # per-input block, in the streamed dtype
_VMEM_LIMIT_BYTES = 40 * 1024 * 1024   # 2 inputs x 2 bufs x 6 MiB = 24 MiB + headroom


# ----------------------------------------------------------------------------
# Kernel 1: fused, tiled L2 / L1 image reductions over a sublane-dense
# (rows, lanes) view of the flattened images.
#   grid = (ceil(rows / block_rows),)      blocks: (block_rows, lanes)
# The output blocks (one per enabled loss, shape (acc_rows, lanes) f32) use a
# constant index map -> they stay resident in VMEM and act as element-wise
# accumulators; the wrapper does the final scalar reduce.
# ----------------------------------------------------------------------------
def _make_image_loss_kernel(want_sq, want_abs, rows, block_rows, lanes):
    ragged = (rows % block_rows) != 0
    if block_rows % 8 == 0:
        groups = block_rows // 8
        acc_rows = 8
    else:
        groups = None            # tiny single-block case (block_rows == rows < 16)
        acc_rows = block_rows

    def _partial(v):
        # (block_rows, lanes) -> (acc_rows, lanes).  The reshape splits whole
        # (8,128) row-tiles, so the axis-0 sum is pure element-wise vadds
        # (no cross-lane / XLU work per step).
        if groups is not None and groups > 1:
            return jnp.sum(v.reshape(groups, 8, lanes), axis=0)
        return v

    def kernel(gen_ref, ref_ref, *out_refs):
        i = pl.program_id(0)

        @pl.when(i == 0)
        def _init():
            for o in out_refs:
                o[...] = jnp.zeros_like(o)

        # Inputs stream in their original dtype; cast per-tile in VMEM.
        d = gen_ref[...].astype(jnp.float32) - ref_ref[...].astype(jnp.float32)

        def _accumulate(dv):
            idx = 0
            if want_sq:
                out_refs[idx][...] += _partial(dv * dv)
                idx += 1
            if want_abs:
                out_refs[idx][...] += _partial(jnp.abs(dv))

        if ragged:
            last = pl.num_programs(0) - 1

            @pl.when(i < last)
            def _full():
                _accumulate(d)

            @pl.when(i == last)
            def _tail():
                row = lax.broadcasted_iota(jnp.int32, (block_rows, lanes), 0)
                valid = (i * block_rows + row) < rows
                _accumulate(jnp.where(valid, d, 0.0))
        else:
            _accumulate(d)

    return kernel, acc_rows


def _build_image_loss_fn(ref_im, want_sq, want_abs, block_bytes=_IMG_BLOCK_BYTES):
    """Returns fn(gen_im) -> {'sq': sum((gen-ref)^2), 'abs': sum(|gen-ref|)}
    containing only the enabled keys.  ref_im's 2D streaming view is built once."""
    assert want_sq or want_abs
    total = 1
    for s in ref_im.shape:
        total *= int(s)

    # Widest lane count (multiple of 128) that exactly divides the flat length
    # -> the reshape is free (no HBM copy) and every row is lane-dense.
    lanes = next((l for l in (4 * _LANE, 2 * _LANE, _LANE) if total % l == 0), None)
    pad = 0
    if lanes is None:
        # Rare fallback (flat length not a multiple of 128): zero-pad BOTH
        # inputs, so the padded diff is 0 and the sums are unchanged.
        # TODO(synk): replace with in-kernel lane masking to avoid the HBM copy.
        lanes = _LANE
        pad = (-total) % _LANE
    rows = (total + pad) // lanes

    itemsize = ref_im.dtype.itemsize
    target_rows = max(16, (block_bytes // (itemsize * lanes)) // 16 * 16)
    block_rows = rows if rows <= target_rows else target_rows
    nsteps = -(-rows // block_rows)

    kernel, acc_rows = _make_image_loss_kernel(
        want_sq, want_abs, rows, block_rows, lanes)
    n_out = int(want_sq) + int(want_abs)

    call = pl.pallas_call(
        kernel,
        out_shape=tuple(jax.ShapeDtypeStruct((acc_rows, lanes), jnp.float32)
                        for _ in range(n_out)),
        grid_spec=pltpu.PrefetchScalarGridSpec(
            num_scalar_prefetch=0,
            grid=(nsteps,),
            in_specs=[pl.BlockSpec((block_rows, lanes), lambda i: (i, 0)),
                      pl.BlockSpec((block_rows, lanes), lambda i: (i, 0))],
            out_specs=tuple(pl.BlockSpec((acc_rows, lanes), lambda i: (0, 0))
                            for _ in range(n_out)),
        ),
        compiler_params=pltpu.CompilerParams(
            dimension_semantics=("arbitrary",),      # reduction axis (resident output)
            vmem_limit_bytes=_VMEM_LIMIT_BYTES,
        ),
    )

    def to_view(im):
        flat = im.reshape(-1)
        if pad:
            flat = jnp.pad(flat, (0, pad))
        return flat.reshape(rows, lanes)

    ref_view = to_view(jnp.asarray(ref_im))          # built once, reused every call

    def fn(gen_im):
        outs = call(to_view(gen_im), ref_view)
        if not isinstance(outs, (tuple, list)):
            outs = (outs,)
        sums = {}
        idx = 0
        if want_sq:
            sums["sq"] = jnp.sum(outs[idx])
            idx += 1
        if want_abs:
            sums["abs"] = jnp.sum(outs[idx])
        return sums

    return fn


# ----------------------------------------------------------------------------
# Kernel 2: Geocross pairwise-distance ratio via the Gram matrix (MXU).
#   latent (B, 18, 512) -> G = x @ x^T (MXU), then the tiny (B,18,18) epilogue
#   emits ratio = sqrt((dsq+1e-9)/(ssq+1e-9)) = A/B.
# TODO(synk): atan2/atan has no guaranteed Mosaic lowering; the tiny (B,18,18)
#             2*atan(ratio) + mean epilogue stays in plain JAX.
# ----------------------------------------------------------------------------
def _geocross_ratio_kernel(lat_ref, r_ref):
    x = lat_ref[...].astype(jnp.float32)                    # (B, S, D)
    x2 = x * x
    n_row = jnp.sum(x2, axis=-1, keepdims=True)             # (B, S, 1)
    n_col = jnp.sum(x2, axis=-1)[:, None, :]                # (B, 1, S)
    g = jnp.einsum("bsd,btd->bst", x, x,
                   preferred_element_type=jnp.float32)      # (B, S, S) on MXU
    s2 = n_row + n_col
    # Clamp at 0: Gram-form cancellation can leave tiny negatives (diagonal /
    # near-duplicate rows); effect on the final loss is << 1e-6 relative.
    dsq = jnp.maximum(s2 - 2.0 * g, 0.0)
    ssq = jnp.maximum(s2 + 2.0 * g, 0.0)
    # atan2(A, B) with A, B > 0  ==  atan(A / B): emit the ratio only.
    r_ref[...] = jnp.sqrt((dsq + 1e-9) / (ssq + 1e-9))


def _geocross_ratio(latent):
    B, S, D = latent.shape  # (B, 18, 512)
    return pl.pallas_call(
        _geocross_ratio_kernel,
        out_shape=jax.ShapeDtypeStruct((B, S, S), jnp.float32),
        grid_spec=pltpu.PrefetchScalarGridSpec(
            num_scalar_prefetch=0,
            grid=(1,),
            in_specs=[pl.BlockSpec((B, S, D), lambda i: (0, 0, 0))],
            out_specs=pl.BlockSpec((B, S, S), lambda i: (0, 0, 0)),
        ),
        compiler_params=pltpu.CompilerParams(dimension_semantics=("arbitrary",)),
    )(latent)


# ----------------------------------------------------------------------------
# LossBuilder wrapper (parameter-free module; weights are plain floats)
# ----------------------------------------------------------------------------
class LossBuilder:
    def __init__(self, ref_im, l2_weight=1, l1_weight=0, geocross_weight=0):
        assert ref_im.shape[2] == ref_im.shape[3]
        self.ref_im = ref_im
        self.l2_weight = l2_weight
        self.l1_weight = l1_weight
        self.geocross_weight = geocross_weight
        self._want_sq = l2_weight > 0
        self._want_abs = l1_weight > 0
        self._img_fn = None
        if self._want_sq or self._want_abs:
            self._img_fn = _build_image_loss_fn(
                jnp.asarray(ref_im), self._want_sq, self._want_abs)

    def __call__(self, latent, gen_im):
        losses = {}
        loss = jnp.float32(0.0)

        _, C, H, W = gen_im.shape
        n = C * H * W

        sums = self._img_fn(gen_im) if self._img_fn is not None else {}

        if self.l2_weight > 0:
            # (gen-ref).pow(2).mean((1,2,3)).clamp(min=0).sum()
            l2 = jnp.maximum(sums["sq"] / n, 0.0)
            losses["L2"] = l2
            loss = loss + float(self.l2_weight) * l2

        if self.l1_weight > 0:
            # (gen-ref).abs().mean((1,2,3)).clamp(min=0).sum()
            l1 = jnp.maximum(sums["abs"] / n, 0.0)
            losses["L1"] = l1
            loss = loss + float(self.l1_weight) * l1

        if self.geocross_weight > 0:
            if latent.shape[1] == 1:
                geo = jnp.float32(0.0)
            else:
                # S=18, D=512 are hard-coded by the reference's .view().
                lat = latent.reshape(-1, 18, 512)
                r = _geocross_ratio(lat)            # (B, 18, 18) = A / B
                d = 2.0 * jnp.arctan(r)             # == 2*atan2(A, B); A, B > 0
                geo = jnp.sum(jnp.mean(d * d * 512.0, axis=(1, 2)) / 8.0)
            losses["Geocross"] = geo
            loss = loss + float(self.geocross_weight) * geo

        return loss, losses


# ----------------------------------------------------------------------------
# Pure-JAX reference (mirrors the PyTorch math) for a sanity check.
# ----------------------------------------------------------------------------
def _ref_forward(ref_im, gen_im, latent, w2, w1, wg):
    l2 = jnp.sum(jnp.clip(jnp.mean((gen_im - ref_im) ** 2, axis=(1, 2, 3)), 0.0))
    l1 = jnp.sum(jnp.clip(jnp.mean(jnp.abs(gen_im - ref_im), axis=(1, 2, 3)), 0.0))
    X = latent.reshape(-1, 1, 18, 512)
    Y = latent.reshape(-1, 18, 1, 512)
    A = jnp.sqrt(jnp.sum((X - Y) ** 2, -1) + 1e-9)
    Bm = jnp.sqrt(jnp.sum((X + Y) ** 2, -1) + 1e-9)
    D = 2.0 * jnp.arctan2(A, Bm)
    geo = jnp.sum(jnp.mean(D ** 2 * 512.0, axis=(1, 2)) / 8.0)
    return w2 * l2 + w1 * l1 + wg * geo


if __name__ == "__main__":
    key = jax.random.PRNGKey(0)
    k1, k2, k3, k4, k5 = jax.random.split(key, 5)

    ref_im = jax.random.normal(k1, (2, 4, 16, 16), dtype=jnp.float32)
    gen_im = jax.random.normal(k2, (2, 4, 16, 16), dtype=jnp.float32)
    latent = jax.random.normal(k3, (2, 18, 512), dtype=jnp.float32)

    # All three losses enabled.
    builder = LossBuilder(ref_im, l2_weight=1, l1_weight=0.5, geocross_weight=0.1)
    loss, losses = builder(latent, gen_im)
    loss = jax.block_until_ready(loss)
    expected = jax.block_until_ready(
        _ref_forward(ref_im, gen_im, latent, 1.0, 0.5, 0.1))
    assert jnp.allclose(loss, expected, rtol=1e-4, atol=1e-4), (loss, expected)

    # Default weights (L2 only): exercises the specialized single-output kernel.
    builder_l2 = LossBuilder(ref_im)
    loss2, _ = builder_l2(latent, gen_im)
    loss2 = jax.block_until_ready(loss2)
    exp2 = jax.block_until_ready(
        _ref_forward(ref_im, gen_im, latent, 1.0, 0.0, 0.0))
    assert jnp.allclose(loss2, exp2, rtol=1e-4, atol=1e-4), (loss2, exp2)

    # Multi-step + ragged-tail path of the tiled image reduction (tiny block
    # override forces several grid steps and a masked partial last block).
    ref_b = jax.random.normal(k4, (2, 3, 64, 64), dtype=jnp.float32)
    gen_b = jax.random.normal(k5, (2, 3, 64, 64), dtype=jnp.float32)
    fn = _build_image_loss_fn(ref_b, True, True, block_bytes=64 * 1024)
    sums = fn(gen_b)
    ssq = jax.block_until_ready(sums["sq"])
    sab = jax.block_until_ready(sums["abs"])
    dd = gen_b - ref_b
    assert jnp.allclose(ssq, jnp.sum(dd * dd), rtol=1e-4, atol=1e-4), ssq
    assert jnp.allclose(sab, jnp.sum(jnp.abs(dd)), rtol=1e-4, atol=1e-4), sab

    print("KERNEL_OK")
</pallas_src>

<mosaic_0001>
module attributes {stable_mosaic.version = 11 : i64} {
  func.func @kernel(%arg0: i32, %arg1: memref<4x512xf32, #tpu.memory_space<vmem>>, %arg2: memref<4x512xf32, #tpu.memory_space<vmem>>, %arg3: memref<4x512xf32, #tpu.memory_space<vmem>>, %arg4: memref<4x512xf32, #tpu.memory_space<vmem>>) attributes {dimension_semantics = [#tpu.dimension_semantics<arbitrary>], iteration_bounds = array<i64: 1>, scalar_prefetch = 0 : i64, scratch_operands = 0 : i64, tpu.core_type = #tpu.core_type<tc>, window_params = [{transform_indices = @transform_0, window_bounds = array<i64: 4, 512>}, {transform_indices = @transform_1, window_bounds = array<i64: 4, 512>}, {pipeline_mode = #tpu.pipeline_mode<synchronous>, transform_indices = @transform_2, window_bounds = array<i64: 4, 512>}, {pipeline_mode = #tpu.pipeline_mode<synchronous>, transform_indices = @transform_3, window_bounds = array<i64: 4, 512>}]} {
    %c0_i32 = arith.constant 0 : i32
    %0 = arith.cmpi eq, %arg0, %c0_i32 : i32
    %1 = arith.extui %0 : i1 to i32
    %c0_i32_0 = arith.constant 0 : i32
    %2 = arith.cmpi ne, %1, %c0_i32_0 : i32
    scf.if %2 {
      %cst = arith.constant 0.000000e+00 : f32
      %14 = vector.broadcast %cst : f32 to vector<4x512xf32>
      %c0_12 = arith.constant 0 : index
      %c0_13 = arith.constant 0 : index
      %15 = vector.load %arg3[%c0_12, %c0_13] : memref<4x512xf32, #tpu.memory_space<vmem>>, vector<4x512xf32>
      tpu.vector_store %arg3[%c0_12, %c0_13], %14 {strides = array<i32>} : memref<4x512xf32, #tpu.memory_space<vmem>>, vector<4x512xf32>,
      %cst_14 = arith.constant 0.000000e+00 : f32
      %16 = vector.broadcast %cst_14 : f32 to vector<4x512xf32>
      %c0_15 = arith.constant 0 : index
      %c0_16 = arith.constant 0 : index
      %17 = vector.load %arg4[%c0_15, %c0_16] : memref<4x512xf32, #tpu.memory_space<vmem>>, vector<4x512xf32>
      tpu.vector_store %arg4[%c0_15, %c0_16], %16 {strides = array<i32>} : memref<4x512xf32, #tpu.memory_space<vmem>>, vector<4x512xf32>,
    } else {
    }
    %c0 = arith.constant 0 : index
    %c0_1 = arith.constant 0 : index
    %3 = vector.load %arg1[%c0, %c0_1] : memref<4x512xf32, #tpu.memory_space<vmem>>, vector<4x512xf32>
    %c0_2 = arith.constant 0 : index
    %c0_3 = arith.constant 0 : index
    %4 = vector.load %arg2[%c0_2, %c0_3] : memref<4x512xf32, #tpu.memory_space<vmem>>, vector<4x512xf32>
    %5 = arith.subf %3, %4 : vector<4x512xf32>
    %c0_4 = arith.constant 0 : index
    %c0_5 = arith.constant 0 : index
    %6 = vector.load %arg3[%c0_4, %c0_5] : memref<4x512xf32, #tpu.memory_space<vmem>>, vector<4x512xf32>
    %7 = arith.mulf %5, %5 : vector<4x512xf32>
    %8 = arith.addf %6, %7 : vector<4x512xf32>
    %c0_6 = arith.constant 0 : index
    %c0_7 = arith.constant 0 : index
    %9 = vector.load %arg3[%c0_6, %c0_7] : memref<4x512xf32, #tpu.memory_space<vmem>>, vector<4x512xf32>
    tpu.vector_store %arg3[%c0_6, %c0_7], %8 {strides = array<i32>} : memref<4x512xf32, #tpu.memory_space<vmem>>, vector<4x512xf32>,
    %c0_8 = arith.constant 0 : index
    %c0_9 = arith.constant 0 : index
    %10 = vector.load %arg4[%c0_8, %c0_9] : memref<4x512xf32, #tpu.memory_space<vmem>>, vector<4x512xf32>
    %11 = math.absf %5 : vector<4x512xf32>
    %12 = arith.addf %10, %11 : vector<4x512xf32>
    %c0_10 = arith.constant 0 : index
    %c0_11 = arith.constant 0 : index
    %13 = vector.load %arg4[%c0_10, %c0_11] : memref<4x512xf32, #tpu.memory_space<vmem>>, vector<4x512xf32>
    tpu.vector_store %arg4[%c0_10, %c0_11], %12 {strides = array<i32>} : memref<4x512xf32, #tpu.memory_space<vmem>>, vector<4x512xf32>,
    return
  }
  func.func @transform_0(%arg0: i32) -> (i32, i32) {
    %c0_i32 = arith.constant 0 : i32
    %c0_i32_0 = arith.constant 0 : i32
    return %arg0, %c0_i32 : i32, i32
  }
  func.func @transform_1(%arg0: i32) -> (i32, i32) {
    %c0_i32 = arith.constant 0 : i32
    %c0_i32_0 = arith.constant 0 : i32
    return %arg0, %c0_i32 : i32, i32
  }
  func.func @transform_2(%arg0: i32) -> (i32, i32) {
    %c0_i32 = arith.constant 0 : i32
    %c0_i32_0 = arith.constant 0 : i32
    %c0_i32_1 = arith.constant 0 : i32
    return %c0_i32, %c0_i32_0 : i32, i32
  }
  func.func @transform_3(%arg0: i32) -> (i32, i32) {
    %c0_i32 = arith.constant 0 : i32
    %c0_i32_0 = arith.constant 0 : i32
    %c0_i32_1 = arith.constant 0 : i32
    return %c0_i32, %c0_i32_0 : i32, i32
  }
}

</mosaic_0001>

<llo_original>
// kernel: tpu_custom_call.1
$region0: #{tpu_custom_call.1}
  #allocation0 [shape = 'u32[]', space=smem, size = 0x4, offset = 0x4, fixed_abs, tag = 'smem constant byte address 0x4 - core index']
  #allocation1 [shape = 'u32[72,128]{1,0:T(1,128)}', space=vmem, size = 0x9000, scoped, tag = 'internal scratch']
  %s0 = inlined_call_operand.hbm [shape: f32[4,512], index: 0, kind: input, shape index: {}]
  %s1 = inlined_call_operand.hbm [shape: f32[4,512], index: 1, kind: input, shape index: {}]
  %s2 = inlined_call_operand.hbm [shape: f32[4,512], index: 2, kind: output, shape index: {0}]
  %s3 = inlined_call_operand.hbm [shape: f32[4,512], index: 3, kind: output, shape index: {1}]
  %4 = xla_tuple %s2, %s3
  %s5 = sld [smem:[#allocation0]]
  $region38: #{tpu_custom_call.1} parent=0
    _
  %s7 = ssub.s32 1, %s5
  %s8 = scalar_select 0, %s7, %s5
  $region1: #{tpu_custom_call.1} parent=0
    #allocation2 [shape = 'u8[8192]{0}', space=vmem, size = 0x2000, scoped, tag = 'input window, operand 0, single buffered']
    #allocation3 [shape = 's32[1]{0}', space=sflag, size = 0x4, scoped, tag = 'scoped memory for tpu_custom_call.1']
    #allocation4 [shape = 's32[1]{0}', space=sflag, size = 0x4, scoped, tag = 'scoped memory for tpu_custom_call.1']
    #allocation5 [shape = 'u8[8192]{0}', space=vmem, size = 0x2000, scoped, tag = 'input window, operand 1, single buffered']
    #allocation6 [shape = 's32[1]{0}', space=sflag, size = 0x4, scoped, tag = 'scoped memory for tpu_custom_call.1']
    #allocation7 [shape = 'u8[8192]{0}', space=vmem, size = 0x2000, scoped, tag = 'output window, operand 0, single buffered']
    #allocation8 [shape = 'u8[8192]{0}', space=vmem, size = 0x2000, scoped, tag = 'output window, operand 1, single buffered']
    #allocation9 [shape = 's32[1]{0}', space=sflag, size = 0x4, scoped, tag = 'scoped memory for tpu_custom_call.1']
    %9 = vsyncpa [#allocation3], 0
    %10 = vsyncpa [#allocation6], 0
    %11 = vsyncpa [#allocation4], 0
    %12 = vsyncpa [#allocation9], 0
    // Predicated region
    $region2: #{tpu_custom_call.1} parent=1 // pred_check
      _
    $region3: #{tpu_custom_call.1} parent=1 // pred_check_branch
      %14 = sbr.rel (0) target = $region5
    $region4: #{tpu_custom_call.1} parent=1 // pred_region
      %16 = vsyncadd [#allocation3], 0
      %s18 = sshll.u32 %s0, 4
      %s19 = int_to_ptr.hbm [resolvable:$true] %s18
      %s20 = sshll.u32 [#allocation2], 4
      %s21 = int_to_ptr.vmem [resolvable:$true] %s20
      %23 = dma.hbm_to_vmem [thread:$0]  %s19, 256, %s21, [#allocation3]
    $region5: #{tpu_custom_call.1} parent=1 // pred_fallthru
      _
    // Predicated region
    $region6: #{tpu_custom_call.1} parent=1 // pred_check
      _
    $region7: #{tpu_custom_call.1} parent=1 // pred_check_branch
      %25 = sbr.rel (0) target = $region9
    $region8: #{tpu_custom_call.1} parent=1 // pred_region
      %27 = vsyncadd [#allocation6], 0
      %s29 = sshll.u32 %s1, 4
      %s30 = int_to_ptr.hbm [resolvable:$true] %s29
      %s31 = sshll.u32 [#allocation5], 4
      %s32 = int_to_ptr.vmem [resolvable:$true] %s31
      %34 = dma.hbm_to_vmem [thread:$0]  %s30, 256, %s32, [#allocation6]
    $region9: #{tpu_custom_call.1} parent=1 // pred_fallthru
      _
    // Predicated region
    $region10: #{tpu_custom_call.1} parent=1 // pred_check
      _
    $region11: #{tpu_custom_call.1} parent=1 // pred_check_branch
      %36 = sbr.rel (0) target = $region13
    $region12: #{tpu_custom_call.1} parent=1 // pred_region
      %38 = dma.done [#allocation3], 256
    $region13: #{tpu_custom_call.1} parent=1 // pred_fallthru
      _
    // Predicated region
    $region14: #{tpu_custom_call.1} parent=1 // pred_check
      _
    $region15: #{tpu_custom_call.1} parent=1 // pred_check_branch
      %40 = sbr.rel (0) target = $region17
    $region16: #{tpu_custom_call.1} parent=1 // pred_region
      %42 = dma.done [#allocation6], 256
    $region17: #{tpu_custom_call.1} parent=1 // pred_fallthru
      _
    %p43 = scmp.eq.s32.totalorder 0, 0
    // Predicated region
    $region18: #{tpu_custom_call.1} parent=1 // pred_check
      %p44 = pneg %p43
    $region19: #{tpu_custom_call.1} parent=1 // pred_check_branch
      %46 = sbr.rel (%p44) target = $region21
    $region20: #{tpu_custom_call.1} parent=1 // pred_region
      %47 = vst [vmem:[#allocation7] sm:$0xff] 0.0
      %48 = vst [vmem:[#allocation7 + $0x8] sm:$0xff] 0.0
      %49 = vst [vmem:[#allocation8] sm:$0xff] 0.0
      %50 = vst [vmem:[#allocation8 + $0x8] sm:$0xff] 0.0
    $region21: #{tpu_custom_call.1} parent=1 // pred_fallthru
      _
    %v51 = vld [vmem:[#allocation2] sm:$0xff]
    %v52 = vld [vmem:[#allocation2 + $0x8] sm:$0xff]
    %v53 = vld [vmem:[#allocation5] sm:$0xff]
    %v54 = vld [vmem:[#allocation5 + $0x8] sm:$0xff]
    %v55 = vsub.f32 %v51, %v53
    %v56 = vsub.f32 %v52, %v54
    %v57 = vld [vmem:[#allocation7] sm:$0xff]
    %v58 = vld [vmem:[#allocation7 + $0x8] sm:$0xff]
    %v59 = vmul.f32 %v55, %v55
    %v60 = vmul.f32 %v56, %v56
    %v61 = vadd.f32 %v57, %v59
    %v62 = vadd.f32 %v58, %v60
    %63 = vst [vmem:[#allocation7] sm:$0xff] %v61
    %64 = vst [vmem:[#allocation7 + $0x8] sm:$0xff] %v62
    %v65 = vld [vmem:[#allocation8] sm:$0xff]
    %v66 = vld [vmem:[#allocation8 + $0x8] sm:$0xff]
    %v67 = vand.u32 2147483647, %v55
    %v68 = vand.u32 2147483647, %v56
    %v69 = vadd.f32 %v65, %v67
    %v70 = vadd.f32 %v66, %v68
    %71 = vst [vmem:[#allocation8] sm:$0xff] %v69
    %72 = vst [vmem:[#allocation8 + $0x8] sm:$0xff] %v70
    // Predicated region
    $region22: #{tpu_custom_call.1} parent=1 // pred_check
      _
    $region23: #{tpu_custom_call.1} parent=1 // pred_check_branch
      %74 = sbr.rel (0) target = $region25
    $region24: #{tpu_custom_call.1} parent=1 // pred_region
      %76 = vsyncadd [#allocation4], 0
      %s78 = sshll.u32 [#allocation7], 4
      %s79 = int_to_ptr.vmem [resolvable:$true] %s78
      %s80 = sshll.u32 %s2, 4
      %s81 = int_to_ptr.hbm [resolvable:$true] %s80
      %83 = dma.vmem_to_hbm [thread:$0]  %s79, 256, %s81, [#allocation4]
    $region25: #{tpu_custom_call.1} parent=1 // pred_fallthru
      _
    // Predicated region
    $region26: #{tpu_custom_call.1} parent=1 // pred_check
      _
    $region27: #{tpu_custom_call.1} parent=1 // pred_check_branch
      %85 = sbr.rel (0) target = $region29
    $region28: #{tpu_custom_call.1} parent=1 // pred_region
      %87 = vsyncadd [#allocation9], 0
      %s89 = sshll.u32 [#allocation8], 4
      %s90 = int_to_ptr.vmem [resolvable:$true] %s89
      %s91 = sshll.u32 %s3, 4
      %s92 = int_to_ptr.hbm [resolvable:$true] %s91
      %94 = dma.vmem_to_hbm [thread:$0]  %s90, 256, %s92, [#allocation9]
    $region29: #{tpu_custom_call.1} parent=1 // pred_fallthru
      _
    // Predicated region
    $region30: #{tpu_custom_call.1} parent=1 // pred_check
      _
    $region31: #{tpu_custom_call.1} parent=1 // pred_check_branch
      %96 = sbr.rel (0) target = $region33
    $region32: #{tpu_custom_call.1} parent=1 // pred_region
      %98 = dma.done [#allocation4], 256
    $region33: #{tpu_custom_call.1} parent=1 // pred_fallthru
      _
    // Predicated region
    $region34: #{tpu_custom_call.1} parent=1 // pred_check
      _
    $region35: #{tpu_custom_call.1} parent=1 // pred_check_branch
      %100 = sbr.rel (0) target = $region37
    $region36: #{tpu_custom_call.1} parent=1 // pred_region
      %102 = dma.done [#allocation9], 256
    $region37: #{tpu_custom_call.1} parent=1 // pred_fallthru
      _
    %103 = vsyncpa [#allocation3], 1
    %104 = vsyncpa [#allocation6], 1
    %105 = vsyncpa [#allocation4], 1
    %106 = vsyncpa [#allocation9], 1

</llo_original>
